<compile_context>
chip_gen: v7x
topology: tpu7x:2x2x1
jax: 0.10.0
libtpu: 0.0.40
codegen_flags: <defaults>
</compile_context>

<pallas_src>
import numpy as np
import jax
import jax.numpy as jnp
from jax.experimental import pallas as pl
from jax.experimental.pallas import tpu as pltpu

_LANES = 128
_SUBLANES = 8
# Per-input-tile budget in (f32) elements: 4 MiB tiles already reach ~85-90% of
# the HBM roofline.  Total VMEM (2 inputs x 2 pipeline buffers + f32 diff +
# bf16 diff + P + out) stays ~20-26 MiB, safely under the 40 MiB scoped limit
# requested below (v7x physical VMEM is 64 MiB; v5e/v6e have 128 MiB).
_BLOCK_ELEMS = (4 * 1024 * 1024) // 4
_VMEM_LIMIT = 40 * 1024 * 1024


def _adaptive_avg_matrix(l, size):
    """(l, size) matrix M with M[i, j] = 1/bin_len_i for j in adaptive bin i."""
    A = np.zeros((l, size), dtype=np.float32)
    for i in range(l):
        start = (i * size) // l
        end = -((-(i + 1) * size) // l)  # ceil((i+1)*size/l)
        A[i, start:end] = 1.0 / float(end - start)
    return A


def _pool_levels(H):
    levels = []
    cnt = 1.0
    for l in (4, 2, 1):
        if l >= H:
            continue
        cnt /= 2.0
        levels.append((l, cnt))
    tot = 1.0 + sum(w for _, w in levels)
    return levels, tot


def _build_pool_matrix(H, W, B0, fold):
    """Fused, pre-scaled bf16 pooling matrix P (fold*H*W, 128) and f32 scale c0.

    Columns hold kron(A_h, A_w).T per level l < H, scaled by
    sqrt(wgt_l / (B0*l*l*tot)), laid out block-diagonally for `fold` folded
    rows.  With this scaling sum((d @ P)**2) equals the sum of the weighted,
    normalized pooled MSE terms.  c0 = 1/(B0*H*W*tot) scales the full-res term.
    """
    levels, tot = _pool_levels(H)
    HW = H * W
    ncols = sum(l * l for l, _ in levels)
    P1 = np.zeros((HW, max(ncols, 1)), dtype=np.float32)
    col = 0
    for l, wgt in levels:
        A_h = _adaptive_avg_matrix(l, H)                 # (l, H)
        A_w = _adaptive_avg_matrix(l, W)                 # (l, W)
        scale = np.sqrt(wgt / (B0 * l * l * tot))
        P1[:, col:col + l * l] = np.kron(A_h, A_w).T * scale
        col += l * l
    Pf = np.kron(np.eye(fold, dtype=np.float32), P1)     # (fold*HW, fold*ncols)
    assert Pf.shape[1] <= _LANES
    P = np.zeros((fold * HW, _LANES), dtype=np.float32)
    P[:, :Pf.shape[1]] = Pf
    c0 = 1.0 / (B0 * HW * tot)
    return jnp.asarray(P, dtype=jnp.bfloat16), float(c0), ncols


def _choose_fold(HW, ncols, B0):
    """Fold k rows into the lane axis for narrow maps (needs k*ncols <= 128)."""
    if HW >= _LANES or ncols == 0 or B0 <= 1:
        return 1
    k_max = min(B0, _LANES // ncols)
    divisors = [k for k in range(1, k_max + 1) if B0 % k == 0]
    aligned = [k for k in divisors if (k * HW) % _LANES == 0]
    return max(aligned) if aligned else max(divisors)


def _choose_block_rows(B_f, row_len):
    """Sublane-aligned row-block size from the VMEM budget; >=2 blocks when
    possible so both v7x TensorCores get work on the 'parallel' grid axis."""
    max_rows = (_BLOCK_ELEMS // max(row_len, 1)) // _SUBLANES * _SUBLANES
    max_rows = max(_SUBLANES, max_rows)
    nb = -(-B_f // max_rows)
    if B_f >= 2 * _SUBLANES:
        nb = max(nb, 2)
    if nb <= 1:
        return B_f                       # single full-extent block (tiny input)
    rows = -(-B_f // nb)
    return -(-rows // _SUBLANES) * _SUBLANES


def _make_hcl_kernel(c0, b_valid, block_b, need_mask):
    """Kernel over one (block_b, row_len) tile of the difference slab."""

    def kernel(x_ref, y_ref, p_ref, out_ref):
        d = x_ref[...].astype(jnp.float32) - y_ref[...].astype(jnp.float32)
        if need_mask:   # zero rows of the tail block past the real batch extent
            row = jax.lax.broadcasted_iota(jnp.int32, d.shape, 0)
            row = row + pl.program_id(0) * block_b
            d = jnp.where(row < b_valid, d, 0.0)
        full = jnp.sum(d * d) * c0                               # full-res MSE term
        pooled = jnp.dot(d.astype(jnp.bfloat16), p_ref[...],
                         preferred_element_type=jnp.float32)     # (block_b, 128)
        partial = full + jnp.sum(pooled * pooled)                # + pooled MSE terms
        out_ref[...] = jnp.broadcast_to(partial, out_ref.shape).astype(out_ref.dtype)

    return kernel


def _hcl_pair_loss(fs, ft, mode='avg'):
    """Loss for one (student, teacher) pair of identical NCHW shape."""
    assert mode == 'avg', "only 'avg' mode implemented"  # TODO(synk): mode='max'
    N, C, H, W = fs.shape
    B0, HW = N * C, H * W
    levels, _ = _pool_levels(H)
    ncols = sum(l * l for l, _ in levels)

    fold = _choose_fold(HW, ncols, B0)
    row_len = fold * HW
    B_f = B0 // fold

    # Free reshapes for contiguous NCHW inputs; dtype (f32 or bf16) preserved.
    x = fs.reshape(B_f, row_len)
    y = ft.reshape(B_f, row_len)

    P, c0, _ = _build_pool_matrix(H, W, B0, fold)

    block_b = _choose_block_rows(B_f, row_len)
    num_blocks = -(-B_f // block_b)
    need_mask = (B_f % block_b) != 0

    kernel = _make_hcl_kernel(c0, B_f, block_b, need_mask)

    bytes_in = x.size * x.dtype.itemsize + y.size * y.dtype.itemsize
    cost = pl.CostEstimate(
        flops=int(4 * B_f * row_len + 2 * B_f * row_len * _LANES
                  + 2 * B_f * _LANES),
        transcendentals=0,
        bytes_accessed=int(bytes_in + P.size * 2
                           + num_blocks * _SUBLANES * _LANES * 4),
    )

    out = pl.pallas_call(
        kernel,
        out_shape=jax.ShapeDtypeStruct((num_blocks, _SUBLANES, _LANES), jnp.float32),
        grid=(num_blocks,),
        in_specs=[
            pl.BlockSpec((block_b, row_len), lambda i: (i, 0)),   # student tile
            pl.BlockSpec((block_b, row_len), lambda i: (i, 0)),   # teacher tile
            pl.BlockSpec((row_len, _LANES), lambda i: (0, 0)),    # pooling matrix
        ],
        out_specs=pl.BlockSpec((1, _SUBLANES, _LANES), lambda i: (i, 0, 0)),
        compiler_params=pltpu.CompilerParams(
            dimension_semantics=("parallel",),
            vmem_limit_bytes=_VMEM_LIMIT),
        cost_estimate=cost,
    )(x, y, P)

    return jnp.sum(out[:, 0, 0])


def hcl(fstudent, fteacher, mode='avg'):
    """Pallas-backed HCL forward: lists of NCHW feature maps -> scalar loss."""
    assert mode in ('avg', 'max')
    assert mode == 'avg', "only 'avg' mode implemented"  # TODO(synk): mode='max'
    loss_all = jnp.float32(0.0)
    for fs, ft in zip(fstudent, fteacher):
        assert fs.shape == ft.shape
        loss_all = loss_all + _hcl_pair_loss(fs, ft, mode)
    return loss_all


def hcl_ref(fstudent, fteacher):
    """Pure-JAX reference (valid when H, W divisible by the pooling levels)."""
    loss_all = 0.0
    for fs, ft in zip(fstudent, fteacher):
        N, C, H, W = fs.shape
        loss = jnp.mean((fs - ft) ** 2)
        cnt, tot = 1.0, 1.0
        for l in (4, 2, 1):
            if l >= H:
                continue
            tfs = fs.reshape(N, C, l, H // l, l, W // l).mean(axis=(3, 5))
            tft = ft.reshape(N, C, l, H // l, l, W // l).mean(axis=(3, 5))
            cnt /= 2.0
            loss = loss + jnp.mean((tfs - tft) ** 2) * cnt
            tot += cnt
        loss_all = loss_all + loss / tot
    return loss_all


if __name__ == "__main__":
    key = jax.random.PRNGKey(0)
    k1, k2, k3, k4 = jax.random.split(key, 4)

    # Two feature-map pairs of different spatial sizes (as a review-KD stack
    # would produce): (N, C, H, W).
    fstudent = [
        jax.random.normal(k1, (2, 4, 16, 16), dtype=jnp.float32),
        jax.random.normal(k2, (2, 8, 8, 8), dtype=jnp.float32),
    ]
    fteacher = [
        jax.random.normal(k3, (2, 4, 16, 16), dtype=jnp.float32),
        jax.random.normal(k4, (2, 8, 8, 8), dtype=jnp.float32),
    ]

    out = hcl(fstudent, fteacher, mode='avg')
    out = jax.block_until_ready(out)

    ref = jax.block_until_ready(hcl_ref(fstudent, fteacher))
    # Tolerance relaxed vs. pure-f32: the pooled terms use bf16 MXU operands
    # (f32 accumulation), which is acceptable for a KD loss.
    assert np.allclose(np.asarray(out), np.asarray(ref), rtol=1e-2, atol=1e-3), (
        out, ref)

    print("KERNEL_OK")
</pallas_src>

<mosaic_0001>
module attributes {stable_mosaic.version = 11 : i64} {
  func.func @kernel(%arg0: i32, %arg1: memref<8x256xf32, #tpu.memory_space<vmem>>, %arg2: memref<8x256xf32, #tpu.memory_space<vmem>>, %arg3: memref<256x128xbf16, #tpu.memory_space<vmem>>, %arg4: memref<1x8x128xf32, #tpu.memory_space<vmem>>) attributes {dimension_semantics = [#tpu.dimension_semantics<parallel>], iteration_bounds = array<i64: 1>, scalar_prefetch = 0 : i64, scratch_operands = 0 : i64, tpu.core_type = #tpu.core_type<tc>, window_params = [{transform_indices = @transform_0, window_bounds = array<i64: 8, 256>}, {transform_indices = @transform_1, window_bounds = array<i64: 8, 256>}, {pipeline_mode = #tpu.pipeline_mode<synchronous>, transform_indices = @transform_2, window_bounds = array<i64: 256, 128>}, {transform_indices = @transform_3, window_bounds = array<i64: 1, 8, 128>}]} {
    %c0 = arith.constant 0 : index
    %c0_0 = arith.constant 0 : index
    %0 = vector.load %arg1[%c0, %c0_0] : memref<8x256xf32, #tpu.memory_space<vmem>>, vector<8x256xf32>
    %c0_1 = arith.constant 0 : index
    %c0_2 = arith.constant 0 : index
    %1 = vector.load %arg2[%c0_1, %c0_2] : memref<8x256xf32, #tpu.memory_space<vmem>>, vector<8x256xf32>
    %2 = arith.subf %0, %1 : vector<8x256xf32>
    %3 = arith.mulf %2, %2 : vector<8x256xf32>
    %4 = vector.shape_cast %3 : vector<8x256xf32> to vector<1x8x256xf32>
    %cst = arith.constant dense<0.000000e+00> : vector<1xf32>
    %5 = vector.multi_reduction <add>, %4, %cst [1, 2] : vector<1x8x256xf32> to vector<1xf32>
    %6 = vector.shape_cast %5 : vector<1xf32> to vector<1x1x1xf32>
    %7 = vector.extract %6[0, 0, 0] : f32 from vector<1x1x1xf32>
    %cst_3 = arith.constant 2.6041668E-4 : f32
    %8 = arith.mulf %7, %cst_3 : f32
    %9 = arith.truncf %2 : vector<8x256xf32> to vector<8x256xbf16>
    %c0_4 = arith.constant 0 : index
    %c0_5 = arith.constant 0 : index
    %10 = vector.load %arg3[%c0_4, %c0_5] : memref<256x128xbf16, #tpu.memory_space<vmem>>, vector<256x128xbf16>
    %cst_6 = arith.constant dense<0.000000e+00> : vector<8x128xf32>
    %11 = tpu.matmul %9, %10, %cst_6 {dimension_numbers = #tpu.dot_dimension_numbers<[1], [0], [0], [1], [0, 0, 1, 1], [], []>} : vector<8x256xbf16>, vector<256x128xbf16>, vector<8x128xf32> -> vector<8x128xf32>
    %12 = arith.mulf %11, %11 : vector<8x128xf32>
    %13 = vector.shape_cast %12 : vector<8x128xf32> to vector<1x8x128xf32>
    %cst_7 = arith.constant dense<0.000000e+00> : vector<1xf32>
    %14 = vector.multi_reduction <add>, %13, %cst_7 [1, 2] : vector<1x8x128xf32> to vector<1xf32>
    %15 = vector.shape_cast %14 : vector<1xf32> to vector<1x1x1xf32>
    %16 = vector.extract %15[0, 0, 0] : f32 from vector<1x1x1xf32>
    %17 = arith.addf %8, %16 : f32
    %18 = vector.broadcast %17 : f32 to vector<1x8x128xf32>
    %c0_8 = arith.constant 0 : index
    %c0_9 = arith.constant 0 : index
    %c0_10 = arith.constant 0 : index
    %19 = vector.load %arg4[%c0_8, %c0_9, %c0_10] : memref<1x8x128xf32, #tpu.memory_space<vmem>>, vector<1x8x128xf32>
    tpu.vector_store %arg4[%c0_8, %c0_9, %c0_10], %18 {strides = array<i32>} : memref<1x8x128xf32, #tpu.memory_space<vmem>>, vector<1x8x128xf32>,
    return
  }
  func.func @transform_0(%arg0: i32) -> (i32, i32) {
    %c0_i32 = arith.constant 0 : i32
    %c0_i32_0 = arith.constant 0 : i32
    return %arg0, %c0_i32 : i32, i32
  }
  func.func @transform_1(%arg0: i32) -> (i32, i32) {
    %c0_i32 = arith.constant 0 : i32
    %c0_i32_0 = arith.constant 0 : i32
    return %arg0, %c0_i32 : i32, i32
  }
  func.func @transform_2(%arg0: i32) -> (i32, i32) {
    %c0_i32 = arith.constant 0 : i32
    %c0_i32_0 = arith.constant 0 : i32
    %c0_i32_1 = arith.constant 0 : i32
    return %c0_i32, %c0_i32_0 : i32, i32
  }
  func.func @transform_3(%arg0: i32) -> (i32, i32, i32) {
    %c0_i32 = arith.constant 0 : i32
    %c0_i32_0 = arith.constant 0 : i32
    %c0_i32_1 = arith.constant 0 : i32
    return %arg0, %c0_i32, %c0_i32_0 : i32, i32, i32
  }
}

</mosaic_0001>

<llo_original>
// kernel: tpu_custom_call.1
$region0: #{tpu_custom_call.1}
  #allocation0 [shape = 'u32[]', space=smem, size = 0x4, offset = 0x4, fixed_abs, tag = 'smem constant byte address 0x4 - core index']
  #allocation1 [shape = 'u32[144,128]{1,0:T(1,128)}', space=vmem, size = 0x12000, scoped, tag = 'internal scratch']
  %s0 = inlined_call_operand.hbm [shape: f32[8,256], index: 0, kind: input, shape index: {}]
  %s1 = inlined_call_operand.hbm [shape: f32[8,256], index: 1, kind: input, shape index: {}]
  %s2 = inlined_call_operand.hbm [shape: bf16[256,128], index: 2, kind: input, shape index: {}]
  %s3 = inlined_call_operand.hbm [shape: f32[1,8,128], index: 3, kind: output, shape index: {}]
  %s4 = sld [smem:[#allocation0]]
  $region34: #{tpu_custom_call.1} parent=0
    _
  %s6 = ssub.s32 1, %s4
  %s7 = scalar_select 0, %s6, %s4
  $region1: #{tpu_custom_call.1} parent=0
    #allocation2 [shape = 'u8[8192]{0}', space=vmem, size = 0x2000, scoped, tag = 'input window, operand 0, single buffered']
    #allocation3 [shape = 's32[1]{0}', space=sflag, size = 0x4, scoped, tag = 'scoped memory for tpu_custom_call.1']
    #allocation4 [shape = 's32[1]{0}', space=sflag, size = 0x4, scoped, tag = 'scoped memory for tpu_custom_call.1']
    #allocation5 [shape = 'u8[8192]{0}', space=vmem, size = 0x2000, scoped, tag = 'input window, operand 1, single buffered']
    #allocation6 [shape = 's32[1]{0}', space=sflag, size = 0x4, scoped, tag = 'scoped memory for tpu_custom_call.1']
    #allocation7 [shape = 'u8[65536]{0}', space=vmem, size = 0x10000, scoped, tag = 'input window, operand 2, single buffered']
    #allocation8 [shape = 'u8[4096]{0}', space=vmem, size = 0x1000, scoped, tag = 'output window, operand 0, single buffered']
    %8 = vsyncpa [#allocation3], 0
    %9 = vsyncpa [#allocation6], 0
    %10 = vsyncpa [#allocation4], 0
    // Predicated region
    $region2: #{tpu_custom_call.1} parent=1 // pred_check
      _
    $region3: #{tpu_custom_call.1} parent=1 // pred_check_branch
      %12 = sbr.rel (0) target = $region5
    $region4: #{tpu_custom_call.1} parent=1 // pred_region
      %s14 = ssub.s32 256, 256
      %15 = vsyncadd [#allocation3], %s14
      %s17 = sshll.u32 [#allocation2], 4
      %s18 = int_to_ptr.vmem [resolvable:$true] %s17
      %20 = dma.hbm_to_vmem [thread:$0]  %s0, 256, %s18, [#allocation3]
    $region5: #{tpu_custom_call.1} parent=1 // pred_fallthru
      _
    // Predicated region
    $region6: #{tpu_custom_call.1} parent=1 // pred_check
      _
    $region7: #{tpu_custom_call.1} parent=1 // pred_check_branch
      %22 = sbr.rel (0) target = $region9
    $region8: #{tpu_custom_call.1} parent=1 // pred_region
      %s24 = ssub.s32 256, 256
      %25 = vsyncadd [#allocation6], %s24
      %s27 = sshll.u32 [#allocation5], 4
      %s28 = int_to_ptr.vmem [resolvable:$true] %s27
      %30 = dma.hbm_to_vmem [thread:$0]  %s1, 256, %s28, [#allocation6]
    $region9: #{tpu_custom_call.1} parent=1 // pred_fallthru
      _
    // Predicated region
    $region10: #{tpu_custom_call.1} parent=1 // pred_check
      _
    $region11: #{tpu_custom_call.1} parent=1 // pred_check_branch
      %32 = sbr.rel (0) target = $region13
    $region12: #{tpu_custom_call.1} parent=1 // pred_region
      %s34 = ssub.s32 2048, 2048
      %35 = vsyncadd [#allocation6], %s34
      %s36 = sshll.u32 [#allocation7], 4
      %s37 = int_to_ptr.vmem [resolvable:$true] %s36
      %42 = dma.hbm_to_vmem [thread:$0]  %s2, 2048, %s37, [#allocation6], 64, 64, 4
    $region13: #{tpu_custom_call.1} parent=1 // pred_fallthru
      _
    // Predicated region
    $region14: #{tpu_custom_call.1} parent=1 // pred_check
      _
    $region15: #{tpu_custom_call.1} parent=1 // pred_check_branch
      %44 = sbr.rel (0) target = $region17
    $region16: #{tpu_custom_call.1} parent=1 // pred_region
      %45 = dma.done [#allocation3], 256
    $region17: #{tpu_custom_call.1} parent=1 // pred_fallthru
      _
    // Predicated region
    $region18: #{tpu_custom_call.1} parent=1 // pred_check
      _
    $region19: #{tpu_custom_call.1} parent=1 // pred_check_branch
      %47 = sbr.rel (0) target = $region21
    $region20: #{tpu_custom_call.1} parent=1 // pred_region
      %48 = dma.done [#allocation6], 256
    $region21: #{tpu_custom_call.1} parent=1 // pred_fallthru
      _
    // Predicated region
    $region22: #{tpu_custom_call.1} parent=1 // pred_check
      _
    $region23: #{tpu_custom_call.1} parent=1 // pred_check_branch
      %50 = sbr.rel (0) target = $region25
    $region24: #{tpu_custom_call.1} parent=1 // pred_region
      %51 = dma.done [#allocation6], 2048
    $region25: #{tpu_custom_call.1} parent=1 // pred_fallthru
      _
    %v53 = vld [vmem:[#allocation2] sm:$0xff]
    %v54 = vld [vmem:[#allocation2 + $0x8] sm:$0xff]
    %v55 = vld [vmem:[#allocation5] sm:$0xff]
    %v56 = vld [vmem:[#allocation5 + $0x8] sm:$0xff]
    %v57 = vsub.f32 %v53, %v55
    %v58 = vsub.f32 %v54, %v56
    %v59 = vmul.f32 %v57, %v57
    %v60 = vmul.f32 %v58, %v58
    %v61 = vadd.f32 %v59, %v60
    %62 = vadd.xlane.f32.xlu0 %v61
    %v63 = vpop.xlane.xlu0 %62
    %v64 = vrot.slane %v63, 4
    %v65 = vadd.f32 %v63, %v64
    %v66 = vrot.slane %v65, 2
    %v67 = vadd.f32 %v65, %v66
    %v68 = vrot.slane %v67, 1
    %v69 = vadd.f32 %v67, %v68
    %s70 = vtos %v69
    %s71 = smul.f32 %s70, 0.00026041668
    %v72 = vpack.c.bf16 %v57, %v57
    %v73 = vpack.c.bf16 %v58, %v58
    %v74 = vld [vmem:[#allocation7] sm:$0xf]
    %v75 = vld [vmem:[#allocation7 + $0x4] sm:$0xf]
    %v76 = vld [vmem:[#allocation7 + $0x8] sm:$0xf]
    %v77 = vld [vmem:[#allocation7 + $0xc] sm:$0xf]
    %v78 = vld [vmem:[#allocation7 + $0x10] sm:$0xf]
    %v79 = vld [vmem:[#allocation7 + $0x14] sm:$0xf]
    %v80 = vld [vmem:[#allocation7 + $0x18] sm:$0xf]
    %v81 = vld [vmem:[#allocation7 + $0x1c] sm:$0xf]
    %v82 = vld [vmem:[#allocation7 + $0x20] sm:$0xf]
    %v83 = vld [vmem:[#allocation7 + $0x24] sm:$0xf]
    %v84 = vld [vmem:[#allocation7 + $0x28] sm:$0xf]
    %v85 = vld [vmem:[#allocation7 + $0x2c] sm:$0xf]
    %v86 = vld [vmem:[#allocation7 + $0x30] sm:$0xf]
    %v87 = vld [vmem:[#allocation7 + $0x34] sm:$0xf]
    %v88 = vld [vmem:[#allocation7 + $0x38] sm:$0xf]
    %v89 = vld [vmem:[#allocation7 + $0x3c] sm:$0xf]
    %v90 = vld [vmem:[#allocation7 + $0x40] sm:$0xf]
    %v91 = vld [vmem:[#allocation7 + $0x44] sm:$0xf]
    %v92 = vld [vmem:[#allocation7 + $0x48] sm:$0xf]
    %v93 = vld [vmem:[#allocation7 + $0x4c] sm:$0xf]
    %v94 = vld [vmem:[#allocation7 + $0x50] sm:$0xf]
    %v95 = vld [vmem:[#allocation7 + $0x54] sm:$0xf]
    %v96 = vld [vmem:[#allocation7 + $0x58] sm:$0xf]
    %v97 = vld [vmem:[#allocation7 + $0x5c] sm:$0xf]
    %v98 = vld [vmem:[#allocation7 + $0x60] sm:$0xf]
    %v99 = vld [vmem:[#allocation7 + $0x64] sm:$0xf]
    %v100 = vld [vmem:[#allocation7 + $0x68] sm:$0xf]
    %v101 = vld [vmem:[#allocation7 + $0x6c] sm:$0xf]
    %v102 = vld [vmem:[#allocation7 + $0x70] sm:$0xf]
    %v103 = vld [vmem:[#allocation7 + $0x74] sm:$0xf]
    %v104 = vld [vmem:[#allocation7 + $0x78] sm:$0xf]
    %v105 = vld [vmem:[#allocation7 + $0x7c] sm:$0xf]
    %v138 = vunpack.c.l.b16 %v74
    %v139 = vunpack.c.l.b16 %v75
    %v140 = vunpack.c.l.b16 %v76
    %v141 = vunpack.c.l.b16 %v77
    %v142 = vunpack.c.l.b16 %v78
    %v143 = vunpack.c.l.b16 %v79
    %v144 = vunpack.c.l.b16 %v80
    %v145 = vunpack.c.l.b16 %v81
    %v146 = vunpack.c.l.b16 %v82
    %v147 = vunpack.c.l.b16 %v83
    %v148 = vunpack.c.l.b16 %v84
    %v149 = vunpack.c.l.b16 %v85
    %v150 = vunpack.c.l.b16 %v86
    %v151 = vunpack.c.l.b16 %v87
    %v152 = vunpack.c.l.b16 %v88
    %v153 = vunpack.c.l.b16 %v89
    %v154 = vunpack.c.l.b16 %v90
    %v155 = vunpack.c.l.b16 %v91
    %v156 = vunpack.c.l.b16 %v92
    %v157 = vunpack.c.l.b16 %v93
    %v158 = vunpack.c.l.b16 %v94
    %v159 = vunpack.c.l.b16 %v95
    %v160 = vunpack.c.l.b16 %v96
    %v161 = vunpack.c.l.b16 %v97
    %v162 = vunpack.c.l.b16 %v98
    %v163 = vunpack.c.l.b16 %v99
    %v164 = vunpack.c.l.b16 %v100
    %v165 = vunpack.c.l.b16 %v101
    %v166 = vunpack.c.l.b16 %v102
    %v167 = vunpack.c.l.b16 %v103
    %v168 = vunpack.c.l.b16 %v104
    %v169 = vunpack.c.l.b16 %v105
    %v170 = vpack.c.b16 %v139, %v138
    %v171 = vpack.c.b16 %v141, %v140
    %v172 = vpack.c.b16 %v143, %v142
    %v173 = vpack.c.b16 %v145, %v144
    %v174 = vpack.c.b16 %v147, %v146
    %v175 = vpack.c.b16 %v149, %v148
    %v176 = vpack.c.b16 %v151, %v150
    %v177 = vpack.c.b16 %v153, %v152
    %v178 = vpack.c.b16 %v155, %v154
    %v179 = vpack.c.b16 %v157, %v156
    %v180 = vpack.c.b16 %v159, %v158
    %v181 = vpack.c.b16 %v161, %v160
    %v182 = vpack.c.b16 %v163, %v162
    %v183 = vpack.c.b16 %v165, %v164
    %v184 = vpack.c.b16 %v167, %v166
    %v185 = vpack.c.b16 %v169, %v168
    %202 = vmatprep.subr.bf16.mxu0 0
    %203 = vmatpush1.bf16.msra.mxu0 %v170
    %204 = vmatprep.subr.bf16.mxu0 0
    %205 = vmatpush1.bf16.msra.mxu0 %v171
    %206 = vmatprep.subr.bf16.mxu0 0
    %207 = vmatpush1.bf16.msra.mxu0 %v172
    %208 = vmatprep.subr.bf16.mxu0 0
    %209 = vmatpush1.bf16.msra.mxu0 %v173
    %210 = vmatprep.subr.bf16.mxu0 0
    %211 = vmatpush1.bf16.msra.mxu0 %v174
    %212 = vmatprep.subr.bf16.mxu0 0
    %213 = vmatpush1.bf16.msra.mxu0 %v175
    %214 = vmatprep.subr.bf16.mxu0 0
    %215 = vmatpush1.bf16.msra.mxu0 %v176
    %216 = vmatprep.subr.bf16.mxu0 0
    %217 = vmatpush1.bf16.msra.mxu0 %v177
    %218 = vmatprep.subr.bf16.mxu0 0
    %219 = vmatpush1.bf16.msra.mxu0 %v178
    %220 = vmatprep.subr.bf16.mxu0 0
    %221 = vmatpush1.bf16.msra.mxu0 %v179
    %222 = vmatprep.subr.bf16.mxu0 0
    %223 = vmatpush1.bf16.msra.mxu0 %v180
    %224 = vmatprep.subr.bf16.mxu0 0
    %225 = vmatpush1.bf16.msra.mxu0 %v181
    %226 = vmatprep.subr.bf16.mxu0 0
    %227 = vmatpush1.bf16.msra.mxu0 %v182
    %228 = vmatprep.subr.bf16.mxu0 0
    %229 = vmatpush1.bf16.msra.mxu0 %v183
    %230 = vmatprep.subr.bf16.mxu0 0
    %231 = vmatpush1.bf16.msra.mxu0 %v184
    %232 = vmatprep.subr.bf16.mxu0 0
    %233 = vmatpush1.bf16.msra.mxu0 %v185
    %234 = vmatprep.mubr.bf16.mxu0 %v73
    %235 = vmatmul.mubr.bf16.gmra.mrb[0].mxu0 %v72
    %v236 = vpop.f32.mrb[0].mxu0
    %v237 = vadd.f32 0.0, %v236
    %v238 = vpop.f32.mrb[0].mxu0
    %v239 = vpop.f32.mrb[0].mxu0
    %v240 = vpop.f32.mrb[0].mxu0
    %241 = vdwg.mxu0
    %v242 = vmul.f32 %v237, %v237
    %243 = vadd.xlane.f32.xlu0 %v242
    %v244 = vpop.xlane.xlu0 %243
    %v245 = vrot.slane %v244, 4
    %v246 = vadd.f32 %v244, %v245
    %v247 = vrot.slane %v246, 2
    %v248 = vadd.f32 %v246, %v247
    %v249 = vrot.slane %v248, 1
    %v250 = vadd.f32 %v248, %v249
    %s251 = vtos %v250
    %s252 = sadd.f32 %s71, %s251
    %v253 = vstv %s252
    %254 = vst [vmem:[#allocation8] sm:$0xff] %v253
    // Predicated region
    $region26: #{tpu_custom_call.1} parent=1 // pred_check
      _
    $region27: #{tpu_custom_call.1} parent=1 // pred_check_branch
      %256 = sbr.rel (0) target = $region29
    $region28: #{tpu_custom_call.1} parent=1 // pred_region
      %s258 = ssub.s32 128, 128
      %259 = vsyncadd [#allocation4], %s258
      %s261 = sshll.u32 [#allocation8], 4
      %s262 = int_to_ptr.vmem [resolvable:$true] %s261
      %264 = dma.vmem_to_hbm [thread:$0]  %s262, 128, %s3, [#allocation4]
    $region29: #{tpu_custom_call.1} parent=1 // pred_fallthru
      _
    // Predicated region
    $region30: #{tpu_custom_call.1} parent=1 // pred_check
      _
    $region31: #{tpu_custom_call.1} parent=1 // pred_check_branch
      %266 = sbr.rel (0) target = $region33
    $region32: #{tpu_custom_call.1} parent=1 // pred_region
      %267 = dma.done [#allocation4], 128
    $region33: #{tpu_custom_call.1} parent=1 // pred_fallthru
      _
    %268 = vsyncpa [#allocation3], 1
    %269 = vsyncpa [#allocation6], 1
    %270 = vsyncpa [#allocation4], 1

</llo_original>
